<compile_context>
chip_gen: v7x
topology: tpu7x:2x2x1
jax: 0.10.0
libtpu: 0.0.40
codegen_flags: <defaults>
</compile_context>

<pallas_src>
import functools

import jax
import jax.numpy as jnp
from jax import lax
from jax.experimental import pallas as pl
from jax.experimental.pallas import tpu as pltpu

_EPS = 1e-6


def _wbbox_kernel(x_ref, o_ref, *, c, w, hw, cx0, cy0, pow2_shift):
    """Accumulate raw spatial moments for one (batch, spatial-tile) grid step.

    x_ref : (1, C, HWt)        lane-dense logits tile (spatial on lanes)
    o_ref : (1, 2*(C-1)+1, 5)  raw-moment accumulator, resident across the
                               spatial ("arbitrary") grid axis:
        rows [0, C-1)       : softmax-mask moments  [m0, m1x, m1y, m2x, m2y]
        rows [C-1, 2*(C-1)) : (logits[1:] * fg) moments (only col 0 used)
        row  2*(C-1)        : fg moments               (only col 0 used)
    Coordinates are centred at (cx0, cy0); the wrapper shifts them back.
    """
    t = pl.program_id(1)

    @pl.when(t == 0)
    def _init():
        o_ref[...] = jnp.zeros_like(o_ref)

    x = x_ref[0].astype(jnp.float32)                       # (C, HWt)
    hwt = x.shape[-1]

    # ---- per-pixel class softmax (EUP approx reciprocal + one Newton step) --
    mx = jnp.max(x, axis=0, keepdims=True)                 # (1, HWt)
    e = jnp.exp(x - mx)                                    # (C, HWt)
    denom = jnp.sum(e, axis=0, keepdims=True)              # (1, HWt), >= 1
    r = pl.reciprocal(denom, approx=True)
    r = r * (2.0 - denom * r)                              # Newton -> ~f32 exact
    masks = e[1:] * r                                      # (C-1, HWt)

    # ---- unnormalized foreground weight: sigmoid(sum(x[1:]) - x[0]) ---------
    fg = jax.nn.sigmoid(jnp.sum(x, axis=0, keepdims=True) - 2.0 * x[0:1])
    x1fg = x[1:] * fg                                      # (C-1, HWt)

    # ---- in-kernel moment rows: [valid, gx, gy, gx^2, gy^2] (centred) -------
    p = lax.broadcasted_iota(jnp.int32, (1, hwt), 1) + t * hwt   # flat index
    valid = (p < hw).astype(jnp.float32)                   # pad-lane mask
    if pow2_shift is not None:                             # exact for pow2 W
        gy = (p >> pow2_shift).astype(jnp.float32)
        gx = (p & (w - 1)).astype(jnp.float32)
    else:
        # f32 div/mod: exact for any realistic image (hw << 2^23); pad lanes
        # are masked out anyway.
        pf = p.astype(jnp.float32)
        gy = jnp.floor(pf / float(w))
        gx = pf - gy * float(w)
    gx = (gx - cx0) * valid
    gy = (gy - cy0) * valid
    mcols = jnp.concatenate([valid, gx, gy, gx * gx, gy * gy], axis=0)  # (5,HWt)

    # ---- one fused MXU call: mask moments + score numerators + fg-sum -------
    lhs = jnp.concatenate([masks, x1fg, fg], axis=0)       # (2*(C-1)+1, HWt)
    mom = lax.dot_general(lhs, mcols, (((1,), (1,)), ((), ())),
                          preferred_element_type=jnp.float32)   # (rows, 5)
    o_ref[...] += mom[None]


def _vmem_capacity_bytes():
    try:
        return int(pltpu.get_tpu_info().vmem_capacity_bytes)
    except Exception:
        return 64 * 1024 * 1024          # assume the smallest (v7x) if unknown


def _pick_spatial_tile(c, hw, max_block_elems):
    """Largest lane-dense spatial tile (multiple of 128) under the block cap."""
    if c * hw <= max_block_elems or hw <= 128:
        return hw, hw                    # single full-extent block, no padding
    hwt = max(128, (max_block_elems // max(c, 1)) // 128 * 128)
    hw_pad = ((hw + hwt - 1) // hwt) * hwt
    return hwt, hw_pad


def weighted_bbox_features(logits_masks, *, height, width, norm_by_img=True,
                           no_score=False, use_conv1d=False, spatial_tile=None):
    """JAX/Pallas equivalent of WeightedBBoxFeatureExtractor.forward."""
    b, c, h, w = logits_masks.shape
    assert h == height and w == width
    # Mirrors the PyTorch module's reuse of arange(height) for both marginals.
    assert h == w, "WeightedBBoxFeatureExtractor assumes height == width"
    assert c >= 2
    cm1 = c - 1
    rows = 2 * cm1 + 1
    hw = h * w

    vmem_cap = _vmem_capacity_bytes()
    # Real VMEM use is ~6-8x the nominal f32 block (sublane padding at small C,
    # fused-matmul operands, temporaries) -> keep blocks at 2 MiB on 64 MiB
    # parts (v7x) and 4 MiB on 128 MiB parts (v5e/v6e).
    max_block_elems = (1024 if vmem_cap >= 100 * 2**20 else 512) * 1024
    if spatial_tile is None:
        hwt, hw_pad = _pick_spatial_tile(c, hw, max_block_elems)
    else:
        hwt = spatial_tile
        hw_pad = ((hw + hwt - 1) // hwt) * hwt
        assert hwt == hw_pad or hwt % 128 == 0
    num_t = hw_pad // hwt

    # lane-dense layout: flatten spatial onto lanes (free reshape for NCHW),
    # pad to the tile multiple (pad pixels are masked out in-kernel).
    x2 = logits_masks.reshape(b, c, hw)
    if hw_pad != hw:
        x2 = jnp.pad(x2, ((0, 0), (0, 0), (0, hw_pad - hw)))

    pow2_shift = (w.bit_length() - 1) if (w & (w - 1)) == 0 else None

    # TODO(synk): at small C (e.g. 4) each vreg carries only C of 8 sublanes;
    # packing 2 batch images per block (reshape to (B//2, 2C, HW)) or a
    # (C, TH, W) layout when W % 128 == 0 would ~2x the VPU/EUP throughput.
    # TODO(synk): when B == 1, split the spatial reduction into two partial
    # accumulators so v7x's second TensorCore has parallel work.
    kernel = functools.partial(
        _wbbox_kernel, c=c, w=w, hw=hw,
        cx0=(w - 1) / 2.0, cy0=(h - 1) / 2.0, pow2_shift=pow2_shift)

    raw = pl.pallas_call(
        kernel,
        out_shape=jax.ShapeDtypeStruct((b, rows, 5), jnp.float32),
        grid_spec=pltpu.PrefetchScalarGridSpec(
            num_scalar_prefetch=0,
            grid=(b, num_t),
            in_specs=[pl.BlockSpec((1, c, hwt), lambda i, t: (i, 0, t))],
            out_specs=pl.BlockSpec((1, rows, 5), lambda i, t: (i, 0, 0)),
        ),
        compiler_params=pltpu.CompilerParams(
            dimension_semantics=("parallel", "arbitrary"),
            vmem_limit_bytes=min(vmem_cap * 3 // 4, 96 * 2**20)),
    )(x2)

    # ---- O(C) finalize in plain XLA (centres/stds/scores + flag glue) -------
    mom = raw[:, :cm1, :]                          # (B, C-1, 5) centred moments
    sc_num = raw[:, cm1:2 * cm1, 0]                # (B, C-1) sum(logits[1:]*fg)
    fg_sum = raw[:, 2 * cm1, 0]                    # (B,)     sum(fg)

    m0 = mom[..., 0]
    m1x, m1y = mom[..., 1], mom[..., 2]
    m2x, m2y = mom[..., 3], mom[..., 4]

    n = float(h)
    c0 = (n - 1.0) / 2.0
    s1 = n * (n - 1.0) / 2.0                       # sum_i i
    s2c = n * (n * n - 1.0) / 12.0                 # sum_i (i - c0)^2
    ms = m0 + _EPS                                 # mask_sums

    # eps terms reproduce the reference's "+eps on every marginal element".
    x_center = (m1x + c0 * m0 + _EPS * s1) / ms
    y_center = (m1y + c0 * m0 + _EPS * s1) / ms
    dcx = x_center - c0
    dcy = y_center - c0
    var_x = (m2x - 2.0 * dcx * m1x + dcx * dcx * m0
             + _EPS * (s2c + dcx * dcx * n)) / ms
    var_y = (m2y - 2.0 * dcy * m1y + dcy * dcy * m0
             + _EPS * (s2c + dcy * dcy * n)) / ms
    x_std = jnp.sqrt(jnp.maximum(var_x, 0.0))
    y_std = jnp.sqrt(jnp.maximum(var_y, 0.0))
    class_scores = sc_num / jnp.maximum(fg_sum[:, None], _EPS)

    if norm_by_img:
        x_center = x_center / width * 2.0 - 1.0
        y_center = y_center / height * 2.0 - 1.0
        x_std = x_std / width * 2.0
        y_std = y_std / height * 2.0

    feats = ([x_center, y_center, x_std, y_std] if no_score
             else [class_scores, x_center, y_center, x_std, y_std])
    out = jnp.stack(feats, axis=2)
    if use_conv1d:
        out = jnp.transpose(out, (0, 2, 1))
    return out


def _reference(x, height, width, norm_by_img, no_score, use_conv1d):
    """Plain-JAX reference mirroring the PyTorch forward, for validation."""
    masks = jax.nn.softmax(x, axis=1)[:, 1:]
    fg = jnp.sum(x[:, 1:], axis=1, keepdims=True) - x[:, 0:1]
    fg = jax.nn.sigmoid(fg)
    fg = fg / jnp.maximum(jnp.sum(fg, axis=(2, 3), keepdims=True), _EPS)
    class_scores = jnp.sum(x[:, 1:] * fg, axis=(2, 3))
    mask_sums = jnp.sum(masks, axis=(2, 3)) + _EPS
    msx = jnp.sum(masks, axis=2) + _EPS
    msy = jnp.sum(masks, axis=3) + _EPS
    grid = jnp.arange(height, dtype=jnp.float32)[None, None, :]
    x_center = jnp.sum(msx * grid, axis=2) / mask_sums
    y_center = jnp.sum(msy * grid, axis=2) / mask_sums
    x_std = jnp.sqrt(jnp.sum(msx * (grid - x_center[..., None]) ** 2, axis=2) / mask_sums)
    y_std = jnp.sqrt(jnp.sum(msy * (grid - y_center[..., None]) ** 2, axis=2) / mask_sums)
    if norm_by_img:
        x_center = x_center / width * 2 - 1
        y_center = y_center / height * 2 - 1
        x_std = x_std / width * 2
        y_std = y_std / height * 2
    feats = ([x_center, y_center, x_std, y_std] if no_score
             else [class_scores, x_center, y_center, x_std, y_std])
    out = jnp.stack(feats, axis=2)
    if use_conv1d:
        out = jnp.transpose(out, (0, 2, 1))
    return out


if __name__ == "__main__":
    key = jax.random.PRNGKey(0)
    B, C, H, W = 2, 4, 16, 16        # 4 classes => 3 foreground parts
    x = jax.random.normal(key, (B, C, H, W), dtype=jnp.float32) * 3.0

    configs = [
        dict(norm_by_img=True, no_score=False, use_conv1d=False),
        dict(norm_by_img=True, no_score=True, use_conv1d=True),
    ]
    for cfg in configs:
        out = jax.block_until_ready(
            weighted_bbox_features(x, height=H, width=W, **cfg))
        ref = _reference(x, H, W, cfg["norm_by_img"], cfg["no_score"],
                         cfg["use_conv1d"])
        assert out.shape == ref.shape, (out.shape, ref.shape)
        assert jnp.allclose(out, ref, rtol=1e-3, atol=1e-3), (
            "mismatch vs reference for %r" % (cfg,))

    # multi-tile accumulation path (hw=256 split into two 128-lane tiles)
    out = jax.block_until_ready(
        weighted_bbox_features(x, height=H, width=W, spatial_tile=128))
    ref = _reference(x, H, W, True, False, False)
    assert jnp.allclose(out, ref, rtol=1e-3, atol=1e-3), "tiled path mismatch"

    # non-power-of-two width + lane-padding/masking path
    B2, C2, SP = 2, 5, 24
    x_odd = jax.random.normal(jax.random.PRNGKey(1), (B2, C2, SP, SP),
                              dtype=jnp.float32) * 2.0
    out2 = jax.block_until_ready(
        weighted_bbox_features(x_odd, height=SP, width=SP, spatial_tile=128))
    ref2 = _reference(x_odd, SP, SP, True, False, False)
    assert out2.shape == ref2.shape, (out2.shape, ref2.shape)
    assert jnp.allclose(out2, ref2, rtol=1e-3, atol=1e-3), "padded path mismatch"

    print("KERNEL_OK")
</pallas_src>

<mosaic_0001>
module attributes {stable_mosaic.version = 11 : i64} {
  func.func @_wbbox_kernel(%arg0: i32, %arg1: i32, %arg2: memref<1x4x256xf32, #tpu.memory_space<vmem>>, %arg3: memref<1x7x5xf32, #tpu.memory_space<vmem>>) attributes {dimension_semantics = [#tpu.dimension_semantics<parallel>, #tpu.dimension_semantics<arbitrary>], iteration_bounds = array<i64: 2, 1>, scalar_prefetch = 0 : i64, scratch_operands = 0 : i64, tpu.core_type = #tpu.core_type<tc>, window_params = [{transform_indices = @transform_0, window_bounds = array<i64: 1, 4, 256>}, {transform_indices = @transform_1, window_bounds = array<i64: 1, 7, 5>}]} {
    %c0_i32 = arith.constant 0 : i32
    %0 = arith.cmpi eq, %arg1, %c0_i32 : i32
    %1 = arith.extui %0 : i1 to i32
    %c0_i32_0 = arith.constant 0 : i32
    %2 = arith.cmpi ne, %1, %c0_i32_0 : i32
    scf.if %2 {
      %cst_18 = arith.constant 0.000000e+00 : f32
      %63 = vector.broadcast %cst_18 : f32 to vector<1x7x5xf32>
      %c0_19 = arith.constant 0 : index
      %c0_20 = arith.constant 0 : index
      %c0_21 = arith.constant 0 : index
      %64 = vector.load %arg3[%c0_19, %c0_20, %c0_21] : memref<1x7x5xf32, #tpu.memory_space<vmem>>, vector<1x7x5xf32>
      tpu.vector_store %arg3[%c0_19, %c0_20, %c0_21], %63 {strides = array<i32>} : memref<1x7x5xf32, #tpu.memory_space<vmem>>, vector<1x7x5xf32>,
    } else {
    }
    %c0 = arith.constant 0 : index
    %c0_1 = arith.constant 0 : index
    %c0_2 = arith.constant 0 : index
    %3 = vector.load %arg2[%c0, %c0_1, %c0_2] : memref<1x4x256xf32, #tpu.memory_space<vmem>>, vector<1x4x256xf32>
    %4 = vector.shape_cast %3 : vector<1x4x256xf32> to vector<4x256xf32>
    %cst = arith.constant dense<0xFF800000> : vector<256xf32>
    %5 = vector.multi_reduction <maximumf>, %4, %cst [0] : vector<4x256xf32> to vector<256xf32>
    %6 = vector.shape_cast %5 : vector<256xf32> to vector<1x256xf32>
    %7 = vector.broadcast %6 : vector<1x256xf32> to vector<4x256xf32>
    %8 = arith.subf %4, %7 : vector<4x256xf32>
    %9 = math.exp %8 : vector<4x256xf32>
    %cst_3 = arith.constant dense<0.000000e+00> : vector<256xf32>
    %10 = vector.multi_reduction <add>, %9, %cst_3 [0] : vector<4x256xf32> to vector<256xf32>
    %11 = vector.shape_cast %10 : vector<256xf32> to vector<1x256xf32>
    %12 = tpu.reciprocal %11 {approx = true} : vector<1x256xf32> -> vector<1x256xf32>
    %13 = arith.mulf %11, %12 : vector<1x256xf32>
    %cst_4 = arith.constant 2.000000e+00 : f32
    %14 = vector.broadcast %cst_4 : f32 to vector<1x256xf32>
    %15 = arith.subf %14, %13 : vector<1x256xf32>
    %16 = arith.mulf %12, %15 : vector<1x256xf32>
    %17 = vector.extract_strided_slice %9 {offsets = [1, 0], sizes = [3, 256], strides = [1, 1]} : vector<4x256xf32> to vector<3x256xf32>
    %18 = vector.broadcast %16 : vector<1x256xf32> to vector<3x256xf32>
    %19 = arith.mulf %17, %18 : vector<3x256xf32>
    %cst_5 = arith.constant dense<0.000000e+00> : vector<256xf32>
    %20 = vector.multi_reduction <add>, %4, %cst_5 [0] : vector<4x256xf32> to vector<256xf32>
    %21 = vector.shape_cast %20 : vector<256xf32> to vector<1x256xf32>
    %22 = vector.extract_strided_slice %4 {offsets = [0, 0], sizes = [1, 256], strides = [1, 1]} : vector<4x256xf32> to vector<1x256xf32>
    %cst_6 = arith.constant 2.000000e+00 : f32
    %23 = vector.broadcast %cst_6 : f32 to vector<1x256xf32>
    %24 = arith.mulf %23, %22 : vector<1x256xf32>
    %25 = arith.subf %21, %24 : vector<1x256xf32>
    %26 = arith.negf %25 : vector<1x256xf32>
    %27 = math.exp %26 : vector<1x256xf32>
    %cst_7 = arith.constant 1.000000e+00 : f32
    %28 = vector.broadcast %cst_7 : f32 to vector<1x256xf32>
    %29 = arith.addf %28, %27 : vector<1x256xf32>
    %30 = arith.divf %28, %29 : vector<1x256xf32>
    %31 = vector.extract_strided_slice %4 {offsets = [1, 0], sizes = [3, 256], strides = [1, 1]} : vector<4x256xf32> to vector<3x256xf32>
    %32 = vector.broadcast %30 : vector<1x256xf32> to vector<3x256xf32>
    %33 = arith.mulf %31, %32 : vector<3x256xf32>
    %34 = tpu.iota {dimensions = array<i32: 1>} : vector<1x256xi32>
    %c256_i32 = arith.constant 256 : i32
    %35 = arith.muli %arg1, %c256_i32 : i32
    %36 = vector.broadcast %35 : i32 to vector<1x256xi32>
    %37 = arith.addi %34, %36 : vector<1x256xi32>
    %c256_i32_8 = arith.constant 256 : i32
    %38 = vector.broadcast %c256_i32_8 : i32 to vector<1x256xi32>
    %39 = arith.cmpi slt, %37, %38 : vector<1x256xi32>
    %40 = arith.extui %39 : vector<1x256xi1> to vector<1x256xi32>
    %41 = arith.sitofp %40 : vector<1x256xi32> to vector<1x256xf32>
    %c4_i32 = arith.constant 4 : i32
    %42 = vector.broadcast %c4_i32 : i32 to vector<1x256xi32>
    %43 = arith.shrsi %37, %42 : vector<1x256xi32>
    %44 = arith.sitofp %43 : vector<1x256xi32> to vector<1x256xf32>
    %c15_i32 = arith.constant 15 : i32
    %45 = vector.broadcast %c15_i32 : i32 to vector<1x256xi32>
    %46 = arith.andi %37, %45 : vector<1x256xi32>
    %47 = arith.sitofp %46 : vector<1x256xi32> to vector<1x256xf32>
    %cst_9 = arith.constant 7.500000e+00 : f32
    %48 = vector.broadcast %cst_9 : f32 to vector<1x256xf32>
    %49 = arith.subf %47, %48 : vector<1x256xf32>
    %50 = arith.mulf %49, %41 : vector<1x256xf32>
    %cst_10 = arith.constant 7.500000e+00 : f32
    %51 = vector.broadcast %cst_10 : f32 to vector<1x256xf32>
    %52 = arith.subf %44, %51 : vector<1x256xf32>
    %53 = arith.mulf %52, %41 : vector<1x256xf32>
    %54 = arith.mulf %50, %50 : vector<1x256xf32>
    %55 = arith.mulf %53, %53 : vector<1x256xf32>
    %56 = tpu.concatenate %41, %50, %53, %54, %55 in 0 : vector<1x256xf32>, vector<1x256xf32>, vector<1x256xf32>, vector<1x256xf32>, vector<1x256xf32> -> vector<5x256xf32>
    %57 = tpu.concatenate %19, %33, %30 in 0 : vector<3x256xf32>, vector<3x256xf32>, vector<1x256xf32> -> vector<7x256xf32>
    %cst_11 = arith.constant dense<0.000000e+00> : vector<7x5xf32>
    %58 = tpu.matmul %57, %56, %cst_11 {dimension_numbers = #tpu.dot_dimension_numbers<[1], [1], [0], [0], [0, 0, 1, 0], [], []>} : vector<7x256xf32>, vector<5x256xf32>, vector<7x5xf32> -> vector<7x5xf32>
    %c0_12 = arith.constant 0 : index
    %c0_13 = arith.constant 0 : index
    %c0_14 = arith.constant 0 : index
    %59 = vector.load %arg3[%c0_12, %c0_13, %c0_14] : memref<1x7x5xf32, #tpu.memory_space<vmem>>, vector<1x7x5xf32>
    %60 = vector.shape_cast %58 : vector<7x5xf32> to vector<1x7x5xf32>
    %61 = arith.addf %59, %60 : vector<1x7x5xf32>
    %c0_15 = arith.constant 0 : index
    %c0_16 = arith.constant 0 : index
    %c0_17 = arith.constant 0 : index
    %62 = vector.load %arg3[%c0_15, %c0_16, %c0_17] : memref<1x7x5xf32, #tpu.memory_space<vmem>>, vector<1x7x5xf32>
    tpu.vector_store %arg3[%c0_15, %c0_16, %c0_17], %61 {strides = array<i32>} : memref<1x7x5xf32, #tpu.memory_space<vmem>>, vector<1x7x5xf32>,
    return
  }
  func.func @transform_0(%arg0: i32, %arg1: i32) -> (i32, i32, i32) {
    %c0_i32 = arith.constant 0 : i32
    %c0_i32_0 = arith.constant 0 : i32
    return %arg0, %c0_i32, %arg1 : i32, i32, i32
  }
  func.func @transform_1(%arg0: i32, %arg1: i32) -> (i32, i32, i32) {
    %c0_i32 = arith.constant 0 : i32
    %c0_i32_0 = arith.constant 0 : i32
    %c0_i32_1 = arith.constant 0 : i32
    return %arg0, %c0_i32, %c0_i32_0 : i32, i32, i32
  }
}

</mosaic_0001>

<llo_original>
// kernel: tpu_custom_call.1
$region0: #{tpu_custom_call.1}
  #allocation0 [shape = 'u32[]', space=smem, size = 0x4, offset = 0x4, fixed_abs, tag = 'smem constant byte address 0x4 - core index']
  #allocation1 [shape = 'u32[144,128]{1,0:T(1,128)}', space=vmem, size = 0x12000, scoped, tag = 'internal scratch']
  %s0 = inlined_call_operand.hbm [shape: f32[2,4,256], index: 0, kind: input, shape index: {}]
  %s1 = inlined_call_operand.vmem [shape: f32[2,7,5], index: 1, kind: output, shape index: {}]
  %s2 = sld [smem:[#allocation0]]
  $region45: #{tpu_custom_call.1} parent=0
    _
  %s4 = ssub.s32 1, %s2
  %s5 = scalar_select 0, %s4, %s2
  $region1: #{tpu_custom_call.1} parent=0
    #allocation2 [shape = 'u8[8192]{0}', space=vmem, size = 0x2000, scoped, tag = 'input window, operand 0']
    #allocation3 [shape = 's32[2]{0}', space=sflag, size = 0x8, scoped, tag = 'scoped memory for tpu_custom_call.1']
    %6 = vsyncpa [#allocation3], 0
    %s7 = scalar_lea.sflag [#allocation3], 1
    %8 = vsyncpa %s7, 0
    loop: start=0, step=1, limit=4
    $region2: #{tpu_custom_call.1} parent=1 // loop_pre_header
      _
    $region3: #{tpu_custom_call.1} parent=1 // loop_header
      %s10 = sphi 0, %s14
      %p11 = scmp.ge.s32.totalorder %s10, 4
      %s17 = sphi 0, %s29
      %s18 = sphi 0, %s25
      %s19 = sphi 0, %s17
      %s20 = sphi 0, %s18
      %s21 = sphi 0, %s19
      %s22 = sphi 0, %s20
      %s34 = sphi 0, %s36
      %s37 = sphi 0, %s34
      %s38 = sphi 0, %s37
      %s54 = sphi 0, %s38
      %s60 = sphi 0, %s62
      %s63 = sphi 0, %s60
      %s64 = sphi 0, %s63
      %s80 = sphi 0, %s64
    $region4: #{tpu_custom_call.1} parent=1 // loop_header_branch
      %13 = sbr.rel (%p11) target = $region8
    $region5: #{tpu_custom_call.1} parent=1 // loop_body
      %s15 = ssub.s32 %s10, 1
      %s16 = ssub.s32 %s10, 2
      %s23 = sadd.s32 1, %s18
      %p24 = scmp.ge.s32.totalorder %s23, 1
      %s25 = scalar_select %p24, 0, %s23
      %s26 = sadd.s32 1, %s17
      %s27 = scalar_select %p24, %s26, %s17
      %p28 = scmp.ge.s32.totalorder %s27, 2
      %s29 = scalar_select %p28, 0, %s27
      %s30 = ssub.s32 %s17, %s29
      %s31 = ssub.s32 %s18, %s25
      %s32 = sor.u32 %s30, %s31
      %p33 = scmp.eq.s32.totalorder %s32, 0
      %s35 = sadd.s32 %s34, 1
      %s36 = scalar_select %p33, %s34, %s35
      %p39 = pneg %p33
      %p40 = scmp.eq.s32.totalorder %s10, 1
      %p41 = por %p39, %p40
      %p42 = scmp.ne.s32.totalorder %s34, %s37
      %p43 = scmp.eq.s32.totalorder %s10, 0
      %p44 = por %p42, %p43
      %p45 = scmp.ne.s32.totalorder %s34, %s37
      %p46 = scmp.eq.s32.totalorder %s15, 1
      %p47 = por %p45, %p46
      %p48 = scmp.ne.s32.totalorder %s37, %s38
      %p49 = scmp.eq.s32.totalorder %s15, 0
      %p50 = por %p48, %p49
      %p51 = scmp.ne.s32.totalorder %s37, %s38
      %p52 = scmp.eq.s32.totalorder %s16, 1
      %p53 = por %p51, %p52
      %p55 = scmp.ne.s32.totalorder %s38, %s54
      %p56 = scmp.eq.s32.totalorder %s16, 0
      %p57 = por %p55, %p56
      %s58 = ssub.s32 %s17, %s29
      %p59 = scmp.eq.s32.totalorder %s58, 0
      %s61 = sadd.s32 %s60, 1
      %s62 = scalar_select %p59, %s60, %s61
      %p65 = pneg %p59
      %p66 = scmp.eq.s32.totalorder %s10, 1
      %p67 = por %p65, %p66
      %p68 = scmp.ne.s32.totalorder %s60, %s63
      %p69 = scmp.eq.s32.totalorder %s10, 0
      %p70 = por %p68, %p69
      %p71 = scmp.ne.s32.totalorder %s60, %s63
      %p72 = scmp.eq.s32.totalorder %s15, 1
      %p73 = por %p71, %p72
      %p74 = scmp.ne.s32.totalorder %s63, %s64
      %p75 = scmp.eq.s32.totalorder %s15, 0
      %p76 = por %p74, %p75
      %p77 = scmp.ne.s32.totalorder %s63, %s64
      %p78 = scmp.eq.s32.totalorder %s16, 1
      %p79 = por %p77, %p78
      %p81 = scmp.ne.s32.totalorder %s64, %s80
      %p82 = scmp.eq.s32.totalorder %s16, 0
      %p83 = por %p81, %p82
      %p84 = scmp.le.s32.totalorder 1, %s10
      %p85 = scmp.lt.s32.totalorder %s10, 3
      %p86 = pnand %p84, %p85
      %p87 = pneg %p86
      // Predicated region
      $region9: #{tpu_custom_call.1} parent=5 // pred_check
        _
      $region10: #{tpu_custom_call.1} parent=5 // pred_check_branch
        %89 = sbr.rel (%p86) target = $region12
      $region11: #{tpu_custom_call.1} parent=5 // pred_region
        %s90 = ssub.s32 %s10, 1
      $region12: #{tpu_custom_call.1} parent=5 // pred_fallthru
        _
      %p91 = scmp.lt.s32.totalorder %s10, 2
      // Predicated region
      $region13: #{tpu_custom_call.1} parent=5 // pred_check
        %p92 = pneg %p91
      $region14: #{tpu_custom_call.1} parent=5 // pred_check_branch
        %94 = sbr.rel (%p92) target = $region16
      $region15: #{tpu_custom_call.1} parent=5 // pred_region
        // Predicated region
        $region17: #{tpu_custom_call.1} parent=15 // pred_check
          %p95 = pneg %p44
        $region18: #{tpu_custom_call.1} parent=15 // pred_check_branch
          %97 = sbr.rel (%p95) target = $region20
        $region19: #{tpu_custom_call.1} parent=15 // pred_region
          %s98 = sand.u32 %s34, 1
          %s99 = scalar_lea.sflag [#allocation3], %s98
          %s100 = sand.u32 %s34, 1
          %s101 = smul.addr %s100, 8
          %s102 = scalar_lea.vmem [#allocation2], %s101
          %s103 = smul.u32 2, %s18
          %s105 = ssub.s32 128, 128
          %106 = vsyncadd %s99, %s105
          %s107 = smul.addr %s17, 2
          %s108 = sadd.s32 %s103, %s107
          %s109 = smul.addr %s108, 64
          %s110 = scalar_lea.hbm %s0, %s109
          %s112 = sshll.u32 %s102, 4
          %s113 = int_to_ptr.vmem [resolvable:$true] %s112
          %115 = dma.hbm_to_vmem [thread:$0]  %s110, 128, %s113, %s99
        $region20: #{tpu_custom_call.1} parent=15 // pred_fallthru
          _
      $region16: #{tpu_custom_call.1} parent=5 // pred_fallthru
        _
      %p116 = scmp.le.s32.totalorder 1, %s10
      %p117 = scmp.lt.s32.totalorder %s10, 3
      %p118 = pnand %p116, %p117
      %p119 = pneg %p118
      // Predicated region
      $region21: #{tpu_custom_call.1} parent=5 // pred_check
        _
      $region22: #{tpu_custom_call.1} parent=5 // pred_check_branch
        %121 = sbr.rel (%p118) target = $region24
      $region23: #{tpu_custom_call.1} parent=5 // pred_region
        %s122 = ssub.s32 %s10, 1
        %s123 = sand.u32 %s37, 1
        %s124 = scalar_lea.sflag [#allocation3], %s123
        %s125 = sand.u32 %s37, 1
        %s126 = smul.addr %s125, 8
        %s127 = scalar_lea.vmem [#allocation2], %s126
        // Predicated region
        $region25: #{tpu_custom_call.1} parent=23 // pred_check
          %p128 = pneg %p50
        $region26: #{tpu_custom_call.1} parent=23 // pred_check_branch
          %130 = sbr.rel (%p128) target = $region28
        $region27: #{tpu_custom_call.1} parent=23 // pred_region
          %131 = dma.done %s124, 128
        $region28: #{tpu_custom_call.1} parent=23 // pred_fallthru
          _
        %s132 = sand.u32 %s37, 1
        %s133 = scalar_lea.sflag [#allocation3], %s132
        %s134 = sand.u32 %s37, 1
        %s135 = smul.addr %s134, 8
        %s136 = scalar_lea.vmem [#allocation2], %s135
        %p137 = pneg %p50
        %p138 = pneg %p47
        %p139 = pneg %p76
        %p140 = pneg %p73
        %p141 = scmp.lt.s32.totalorder %s19, 1
        %s142 = scalar_select %p141, %s19, 1
        %s143 = smul.addr %s142, 8
        %s144 = scalar_lea.vmem %s1, %s143
        %s145 = smul.u32 2, %s20
        %p146 = scmp.lt.s32.totalorder %s19, 1
        %s147 = scalar_select %p146, %s19, 1
        %s148 = smul.addr %s147, 8
        %s149 = scalar_lea.vmem %s1, %s148
        %p150 = scmp.eq.s32.totalorder %s20, 0
        // Predicated region
        $region29: #{tpu_custom_call.1} parent=23 // pred_check
          %p151 = pneg %p150
        $region30: #{tpu_custom_call.1} parent=23 // pred_check_branch
          %153 = sbr.rel (%p151) target = $region32
        $region31: #{tpu_custom_call.1} parent=23 // pred_region
          %vm154 = vcmask 38912
          %155 = vst.msk [vmem:[%s149] sm:$0x7f] %vm154, 0.0
        $region32: #{tpu_custom_call.1} parent=23 // pred_fallthru
          _
        %v156 = vld [vmem:[%s127] sm:$0xff]
        %v158 = vcombine.high %v156, %v156
        %vm160 = vcmask 1043456
        %v161 = vsel %vm160, %v156, -inf
        %v162 = vrot.slane %v161, 4
        %v163 = vmax.f32 %v161, %v162
        %v164 = vrot.slane %v163, 2
        %v165 = vmax.f32 %v163, %v164
        %v166 = vrot.slane %v165, 1
        %v167 = vmax.f32 %v165, %v166
        %v168 = vsel %vm160, %v158, -inf
        %v169 = vrot.slane %v168, 4
        %v170 = vmax.f32 %v168, %v169
        %v171 = vrot.slane %v170, 2
        %v172 = vmax.f32 %v170, %v171
        %v173 = vrot.slane %v172, 1
        %v174 = vmax.f32 %v172, %v173
        %v177 = vcombine.low %v167, %v174
        %v179 = vsub.f32 %v156, %v177
        %v180 = vmul.f32 %v179, 1.442695
        %v181 = vpow.pop %v180
        %v183 = vcombine.high %v181, %v181
        %v185 = vsel %vm160, %v181, 0.0
        %v186 = vrot.slane %v185, 4
        %v187 = vadd.f32 %v185, %v186
        %v188 = vrot.slane %v187, 2
        %v189 = vadd.f32 %v187, %v188
        %v190 = vrot.slane %v189, 1
        %v191 = vadd.f32 %v189, %v190
        %v192 = vsel %vm160, %v183, 0.0
        %v193 = vrot.slane %v192, 4
        %v194 = vadd.f32 %v192, %v193
        %v195 = vrot.slane %v194, 2
        %v196 = vadd.f32 %v194, %v195
        %v197 = vrot.slane %v196, 1
        %v198 = vadd.f32 %v196, %v197
        %v199 = vrcp.pop %v191
        %v200 = vrcp.pop %v198
        %v201 = vmul.f32 %v191, %v199
        %v202 = vmul.f32 %v198, %v200
        %v203 = vsub.f32 2.0, %v201
        %v204 = vsub.f32 2.0, %v202
        %v205 = vmul.f32 %v199, %v203
        %v206 = vmul.f32 %v200, %v204
        %v209 = vcombine.low %v205, %v206
        %v210 = vrot.slane %v209, 7
        %v212 = vmul.f32 %v181, %v210
        %v213 = vsel %vm160, %v156, 0.0
        %v214 = vrot.slane %v213, 4
        %v215 = vadd.f32 %v213, %v214
        %v216 = vrot.slane %v215, 2
        %v217 = vadd.f32 %v215, %v216
        %v218 = vrot.slane %v217, 1
        %v219 = vadd.f32 %v217, %v218
        %v220 = vsel %vm160, %v158, 0.0
        %v221 = vrot.slane %v220, 4
        %v222 = vadd.f32 %v220, %v221
        %v223 = vrot.slane %v222, 2
        %v224 = vadd.f32 %v222, %v223
        %v225 = vrot.slane %v224, 1
        %v226 = vadd.f32 %v224, %v225
        %v227 = vmul.f32 %v156, 2.0
        %v229 = vlaneseq
        %v230 = vshrl.u32 %v229, 7
        %v231 = vsub.s32 0, %v230
        %v232 = vrot.slane %v227, %v231
        %v233 = vlaneseq
        %v234 = vshrl.u32 %v233, 7
        %v235 = vsub.s32 4, %v234
        %v236 = vrot.slane %v227, %v235
        %v239 = vsub.f32 %v219, %v232
        %v240 = vsub.f32 %v226, %v236
        %v241 = vxor.u32 %v239, 2147483648
        %v242 = vxor.u32 %v240, 2147483648
        %v243 = vmul.f32 %v241, 1.442695
        %v244 = vpow.pop %v243
        %v245 = vmul.f32 %v242, 1.442695
        %v246 = vpow.pop %v245
        %v247 = vadd.f32 %v244, 1.0
        %v248 = vadd.f32 %v246, 1.0
        %v249 = vrcp.pop %v247
        %v250 = vmul.f32 1.0, %v249
        %v251 = vrcp.pop %v248
        %v252 = vmul.f32 1.0, %v251
        %v253 = vlaneseq
        %v254 = vshrl.u32 %v253, 7
        %v255 = vsub.s32 0, %v254
        %v256 = vrot.slane %v250, %v255
        %v257 = vlaneseq
        %v258 = vshrl.u32 %v257, 7
        %v259 = vsub.s32 0, %v258
        %v260 = vrot.slane %v252, %v259
        %v263 = vcombine.low %v256, %v260
        %v264 = vrot.slane %v263, 7
        %v266 = vmul.f32 %v156, %v264
        %v267 = vlaneseq
        %v268 = vand.u32 %v267, 127
        %v269 = vadd.s32 %v268, 128
        %s270 = smul.u32 %s20, 256
        %v271 = vstv %s270
        %v272 = vadd.s32 %v268, %v271
        %v273 = vadd.s32 %v269, %v271
        %vm274 = vcmp.lt.s32.totalorder %v272, 256
        %vm275 = vcmp.lt.s32.totalorder %v273, 256
        %v276 = vsel %vm274, 1, 0
        %v277 = vsel %vm275, 1, 0
        %v278 = vcvt.s32.f32 %v276
        %v279 = vcvt.s32.f32 %v277
        %v280 = vshra.s32 %v272, 4
        %v281 = vshra.s32 %v273, 4
        %v282 = vcvt.s32.f32 %v280
        %v283 = vcvt.s32.f32 %v281
        %v284 = vand.u32 %v272, 15
        %v285 = vand.u32 %v273, 15
        %v286 = vcvt.s32.f32 %v284
        %v287 = vcvt.s32.f32 %v285
        %v288 = vsub.f32 %v286, 7.5
        %v289 = vsub.f32 %v287, 7.5
        %v290 = vmul.f32 %v288, %v278
        %v291 = vmul.f32 %v289, %v279
        %v292 = vsub.f32 %v282, 7.5
        %v293 = vsub.f32 %v283, 7.5
        %v294 = vmul.f32 %v292, %v278
        %v295 = vmul.f32 %v293, %v279
        %v296 = vmul.f32 %v290, %v290
        %v297 = vmul.f32 %v291, %v291
        %v298 = vmul.f32 %v294, %v294
        %v299 = vmul.f32 %v295, %v295
        %vm300 = vcmask 1040384
        %v301 = vsel %vm300, %v278, %v290
        %v302 = vsel %vm300, %v279, %v291
        %vm303 = vcmask 1041408
        %v304 = vsel %vm303, %v301, %v294
        %v305 = vsel %vm303, %v302, %v295
        %vm306 = vcmask 1042432
        %v307 = vsel %vm306, %v304, %v296
        %v308 = vsel %vm306, %v305, %v297
        %v309 = vsel %vm160, %v307, %v298
        %v310 = vsel %vm160, %v308, %v299
        %v312 = vcombine.high %v212, %v212
        %v313 = vrot.slane %v212, 1
        %v314 = vrot.slane %v312, 1
        %v318 = vcombine.high %v266, %v266
        %v319 = vrot.slane %v266, 6
        %v320 = vrot.slane %v318, 6
        %v325 = vrot.slane %v250, 2
        %v326 = vrot.slane %v252, 2
        %v329 = vsel %vm306, %v313, %v319
        %v330 = vsel %vm306, %v314, %v320
        %vm331 = vcmask 1045504
        %v332 = vsel %vm331, %v329, %v325
        %v333 = vsel %vm331, %v330, %v326
        %334 = vmatprep.subr.mxu0 %v310
        %335 = vmatpush1.xpose.msra.mxu0 %v309
        %336 = vmatprep.subr.mxu0 0.0
        %337 = vmatpush1.xpose.msra.mxu0 0.0
        %338 = vmatprep.subr.mxu0 0.0
        %339 = vmatpush1.xpose.msra.mxu0 0.0
        %340 = vmatprep.subr.mxu0 0.0
        %341 = vmatpush1.xpose.msra.mxu0 0.0
        %342 = vmatprep.subr.mxu0 0.0
        %343 = vmatpush1.xpose.msra.mxu0 0.0
        %344 = vmatprep.subr.mxu0 0.0
        %345 = vmatpush1.xpose.msra.mxu0 0.0
        %346 = vmatprep.subr.mxu0 0.0
        %347 = vmatpush1.xpose.msra.mxu0 0.0
        %348 = vmatprep.subr.mxu0 0.0
        %349 = vmatpush1.xpose.msra.mxu0 0.0
        %350 = vmatprep.subr.mxu0 0.0
        %351 = vmatpush1.xpose.msra.mxu0 0.0
        %352 = vmatprep.subr.mxu0 0.0
        %353 = vmatpush1.xpose.msra.mxu0 0.0
        %354 = vmatprep.subr.mxu0 0.0
        %355 = vmatpush1.xpose.msra.mxu0 0.0
        %356 = vmatprep.subr.mxu0 0.0
        %357 = vmatpush1.xpose.msra.mxu0 0.0
        %358 = vmatprep.subr.mxu0 0.0
        %359 = vmatpush1.xpose.msra.mxu0 0.0
        %360 = vmatprep.subr.mxu0 0.0
        %361 = vmatpush1.xpose.msra.mxu0 0.0
        %362 = vmatprep.subr.mxu0 0.0
        %363 = vmatpush1.xpose.msra.mxu0 0.0
        %364 = vmatprep.subr.mxu0 0.0
        %365 = vmatpush1.xpose.msra.mxu0 0.0
        %366 = vmatprep.subr.mxu0 0.0
        %367 = vmatpush1.xpose.msra.mxu0 0.0
        %368 = vmatprep.subr.mxu0 0.0
        %369 = vmatpush1.xpose.msra.mxu0 0.0
        %370 = vmatprep.subr.mxu0 0.0
        %371 = vmatpush1.xpose.msra.mxu0 0.0
        %372 = vmatprep.subr.mxu0 0.0
        %373 = vmatpush1.xpose.msra.mxu0 0.0
        %374 = vmatprep.subr.mxu0 0.0
        %375 = vmatpush1.xpose.msra.mxu0 0.0
        %376 = vmatprep.subr.mxu0 0.0
        %377 = vmatpush1.xpose.msra.mxu0 0.0
        %378 = vmatprep.subr.mxu0 0.0
        %379 = vmatpush1.xpose.msra.mxu0 0.0
        %380 = vmatprep.subr.mxu0 0.0
        %381 = vmatpush1.xpose.msra.mxu0 0.0
        %382 = vmatprep.subr.mxu0 0.0
        %383 = vmatpush1.xpose.msra.mxu0 0.0
        %384 = vmatprep.subr.mxu0 0.0
        %385 = vmatpush1.xpose.msra.mxu0 0.0
        %386 = vmatprep.subr.mxu0 0.0
        %387 = vmatpush1.xpose.msra.mxu0 0.0
        %388 = vmatprep.subr.mxu0 0.0
        %389 = vmatpush1.xpose.msra.mxu0 0.0
        %390 = vmatprep.subr.mxu0 0.0
        %391 = vmatpush1.xpose.msra.mxu0 0.0
        %392 = vmatprep.subr.mxu0 0.0
        %393 = vmatpush1.xpose.msra.mxu0 0.0
        %394 = vmatprep.subr.mxu0 0.0
        %395 = vmatpush1.xpose.msra.mxu0 0.0
        %396 = vmatprep.subr.mxu0 0.0
        %397 = vmatpush1.xpose.msra.mxu0 0.0
        %398 = vmatprep.mubr.f32.mxu0 %v333
        %399 = vmatmul.mubr.f32.gmra.mrb[0].mxu0 %v332
        %v400 = vpop.f32.mrb[0].mxu0
        %v401 = vadd.f32 0.0, %v400
        %v402 = vpop.f32.mrb[0].mxu0
        %403 = vdwg.mxu0
        %v404 = vld [vmem:[%s149] sm:$0x7f]
        %v405 = vadd.f32 %v404, %v401
        %vm406 = vcmask 38912
        %407 = vst.msk [vmem:[%s149] sm:$0x7f] %vm406, %v405
        %p408 = scmp.lt.s32.totalorder %s19, 1
        %s409 = scalar_select %p408, %s19, 1
        %s410 = smul.addr %s409, 8
        %s411 = scalar_lea.vmem %s1, %s410
        // Predicated region
        $region33: #{tpu_custom_call.1} parent=23 // pred_check
          %p412 = pneg %p73
        $region34: #{tpu_custom_call.1} parent=23 // pred_check_branch
          %414 = sbr.rel (%p412) target = $region36
        $region35: #{tpu_custom_call.1} parent=23 // pred_region
          _
        $region36: #{tpu_custom_call.1} parent=23 // pred_fallthru
          _
      $region24: #{tpu_custom_call.1} parent=5 // pred_fallthru
        _
      %p415 = scmp.le.s32.totalorder 2, %s10
      // Predicated region
      $region37: #{tpu_custom_call.1} parent=5 // pred_check
        %p416 = pneg %p415
      $region38: #{tpu_custom_call.1} parent=5 // pred_check_branch
        %418 = sbr.rel (%p416) target = $region40
      $region39: #{tpu_custom_call.1} parent=5 // pred_region
        %s419 = ssub.s32 %s10, 2
        // Predicated region
        $region41: #{tpu_custom_call.1} parent=39 // pred_check
          %p420 = pneg %p79
        $region42: #{tpu_custom_call.1} parent=39 // pred_check_branch
          %422 = sbr.rel (%p420) target = $region44
        $region43: #{tpu_custom_call.1} parent=39 // pred_region
          %p423 = scmp.lt.s32.totalorder %s21, 1
          %s424 = scalar_select %p423, %s21, 1
          %s425 = smul.addr %s424, 8
          %s426 = scalar_lea.vmem %s1, %s425
        $region44: #{tpu_custom_call.1} parent=39 // pred_fallthru
          _
      $region40: #{tpu_custom_call.1} parent=5 // pred_fallthru
        _
    $region6: #{tpu_custom_call.1} parent=1 // loop_footer
      %s14 = sadd.s32 1, %s10
    $region7: #{tpu_custom_call.1} parent=1 // loop_footer_branch
      %9 = sbr.rel target = $region3
    $region8: #{tpu_custom_call.1} parent=1 // loop_exit
      _
    %427 = vsyncpa [#allocation3], 1
    %s428 = scalar_lea.sflag [#allocation3], 1
    %429 = vsyncpa %s428, 1

</llo_original>
